<compile_context>
chip_gen: v7x
topology: tpu7x:2x2x1
jax: 0.10.0
libtpu: 0.0.40
codegen_flags: <defaults>
</compile_context>

<pallas_src>
import functools

import jax
import jax.numpy as jnp
from jax.experimental import pallas as pl
from jax.experimental.pallas import tpu as pltpu


def _patch_embed_kernel(x_ref, w_ref, b_ref, o_ref):
    # x_ref: (1, tN, K)   w_ref: (K, tE)   b_ref: (1, tE)   o_ref: (1, tN, tE)
    acc = jnp.dot(x_ref[0], w_ref[...], preferred_element_type=jnp.float32)  # MXU
    acc = acc + b_ref[...].astype(jnp.float32)        # bias broadcast over tokens
    o_ref[0] = acc.astype(o_ref.dtype)


def _round_up(n, m):
    return ((n + m - 1) // m) * m


def _vmem_capacity_bytes():
    """Physical VMEM per core; conservative 64 MiB (v7x) fallback if the query fails."""
    try:
        info = pltpu.get_tpu_info()
        cap = getattr(info, "vmem_capacity_bytes", None)
        if cap:
            return int(cap)
    except Exception:
        pass
    return 64 * 1024 * 1024


def _largest_divisor_tile(n, target, align):
    """Largest divisor of n that is <= target and a multiple of `align`;
    falls back to the full dimension (always a legal block shape).  Only used for the
    embed axis, where n is already a multiple of `align` (128)."""
    if n <= target:
        return n
    for t in range(min(target, n), align - 1, -1):
        if n % t == 0 and t % align == 0:
            return t
    return n


def _choose_token_tile(N, K, tE, x_itemsize, out_itemsize, budget_bytes):
    """Token-tile rows such that the double-buffered x + out tiles fit `budget_bytes`."""
    per_row = 2 * (K * x_itemsize + tE * out_itemsize)      # double-buffered x + out
    t = max(8, budget_bytes // max(1, per_row))
    t = min(t, 2048)                                        # diminishing returns past ~2K
    align = 256 if t >= 256 else 8                          # MXU-friendly when large
    t = max(align, (t // align) * align)
    t = min(t, _round_up(N, 8))                             # never exceed token count
    return max(8, _round_up(t, 8))


def patch_embed(x, weight, bias, patch_size, compute_dtype=None, out_dtype=None):
    """x: [B, C, H, W] (NCHW).  weight: [E, C, p, p].  bias: [E].
    Returns [B, N, E] with N = (H/p)*(W/p), equal to proj(x).flatten(2).transpose(1,2)."""
    B, C, H, W = x.shape
    E = weight.shape[0]
    p = patch_size
    assert H % p == 0 and W % p == 0
    Hp, Wp = H // p, W // p
    N = Hp * Wp
    K = C * p * p
    if compute_dtype is None:
        compute_dtype = x.dtype
    if out_dtype is None:
        out_dtype = x.dtype

    # ---- glue: patchify.  [B,C,H,W] -> [B,C,Hp,p,Wp,p] -> [B,Hp,Wp,C,p,p] -> [B,N,K]
    # (producer may fuse into the pallas_call input DMA, see allow_input_fusion)
    # TODO(synk): verify via xprof that the patchify fuses; if it materializes, accept
    # NHWC activations (K ordered kh,kw,c -> p*C-element contiguous runs) or DMA raw
    # NCHW row-blocks and reorder in VMEM instead.
    xp = x.reshape(B, C, Hp, p, Wp, p)
    xp = jnp.transpose(xp, (0, 2, 4, 1, 3, 5))
    xp = xp.reshape(B, N, K).astype(compute_dtype)

    # ---- weights: Conv2d [E,C,p,p] -> [K,E]; pad E to a multiple of 128 (lane-dense out).
    E_pad = _round_up(E, 128)
    w = weight.reshape(E, K).T.astype(compute_dtype)          # (K, E)
    b = bias.astype(jnp.float32)
    if E_pad != E:
        w = jnp.pad(w, ((0, 0), (0, E_pad - E)))              # zero columns -> exact
        b = jnp.pad(b, (0, E_pad - E))
    b = b.reshape(1, E_pad)
    # TODO(synk): K is left unpadded (legal as a full-dim block); padding K to 128 would
    # cost an extra HBM pass over the activation for small-p configs.

    x_itemsize = jnp.dtype(compute_dtype).itemsize
    out_itemsize = jnp.dtype(out_dtype).itemsize

    # ---- per-generation VMEM budget (≈48 MiB on v7x, ≈96 MiB on v5e/v6e).
    vmem_ceiling = int(_vmem_capacity_bytes() * 0.75)

    # ---- embed tiling: keep the whole weight resident (nE = 1) whenever it fits a
    # third of the budget; otherwise fall back to 128-aligned divisors of E_pad.
    if 2 * K * E_pad * x_itemsize <= vmem_ceiling // 3:
        tE = E_pad
    else:
        tE = _largest_divisor_tile(E_pad, 512, 128)
    nE = E_pad // tE

    # ---- token tiling: size from remaining VMEM (weight + bias + 1 MiB headroom removed).
    weight_bytes = 2 * K * tE * x_itemsize + 2 * tE * 4
    token_budget = max(4 * 1024 * 1024, vmem_ceiling - weight_bytes - (1 << 20))
    tN = _choose_token_tile(N, K, tE, x_itemsize, out_itemsize, token_budget)
    nN = pl.cdiv(N, tN)

    vmem_need = (2 * tN * K * x_itemsize
                 + 2 * tN * tE * out_itemsize
                 + 2 * K * tE * x_itemsize
                 + 2 * tE * 4)
    vmem_limit = int(min(vmem_ceiling,
                         max(int(vmem_need * 1.25) + (1 << 20), 16 * 1024 * 1024)))

    cost = pl.CostEstimate(
        flops=2 * B * N * K * E_pad,
        transcendentals=0,
        bytes_accessed=(xp.size * x_itemsize * nE       # activation re-read nE times
                        + w.size * x_itemsize
                        + b.size * 4
                        + B * N * E_pad * out_itemsize),
    )

    out = pl.pallas_call(
        _patch_embed_kernel,
        out_shape=jax.ShapeDtypeStruct((B, N, E_pad), out_dtype),
        grid_spec=pltpu.PrefetchScalarGridSpec(
            num_scalar_prefetch=0,
            # E varies slowest (and is normally a single block): the (K, tE) weight
            # tile's block index is constant across the inner B/N axes, so Mosaic
            # keeps it VMEM-resident and the activation streams once.
            grid=(nE, B, nN),
            in_specs=[
                pl.BlockSpec((1, tN, K), lambda e, b_, n: (b_, n, 0)),
                pl.BlockSpec((K, tE), lambda e, b_, n: (0, e)),
                pl.BlockSpec((1, tE), lambda e, b_, n: (0, e)),
            ],
            out_specs=pl.BlockSpec((1, tN, tE), lambda e, b_, n: (b_, n, e)),
        ),
        compiler_params=pltpu.CompilerParams(
            dimension_semantics=("parallel", "parallel", "parallel"),
            vmem_limit_bytes=vmem_limit,
            # Permit XLA to fuse the patchify reshape/transpose producer into the
            # kernel's input, avoiding a separate full-activation HBM round trip.
            allow_input_fusion=[True, False, False],
        ),
        cost_estimate=cost,
    )(xp, w, b)

    if E_pad != E:
        # TODO(synk): when the consumer tolerates padded embeddings, return the E_pad-wide
        # tensor (or fuse this slice downstream) to avoid an extra HBM pass.
        out = out[:, :, :E]
    return out


def reference_patch_embed(x, weight, bias, patch_size):
    """Pure-JAX reference matching nn.Conv2d(stride=kernel_size) + flatten + transpose."""
    out = jax.lax.conv_general_dilated(
        x, weight,
        window_strides=(patch_size, patch_size),
        padding="VALID",
        dimension_numbers=("NCHW", "OIHW", "NCHW"),
    ) + bias.reshape(1, -1, 1, 1)
    B, E, Hp, Wp = out.shape
    return jnp.transpose(out.reshape(B, E, Hp * Wp), (0, 2, 1))


if __name__ == "__main__":
    patch_size = 4
    in_chans = 4
    embed_dim = 32
    B, H, W = 2, 16, 16

    key = jax.random.PRNGKey(0)
    kx, kw, kb = jax.random.split(key, 3)

    x = jax.random.normal(kx, (B, in_chans, H, W), dtype=jnp.float32)
    # Deterministic synthetic parameters (same shapes as nn.Conv2d(in_chans, embed_dim, p, p))
    weight = jax.random.normal(kw, (embed_dim, in_chans, patch_size, patch_size),
                               dtype=jnp.float32) * 0.05
    bias = jax.random.normal(kb, (embed_dim,), dtype=jnp.float32) * 0.05

    fn = jax.jit(functools.partial(patch_embed, patch_size=patch_size))
    out = jax.block_until_ready(fn(x, weight, bias))

    ref = reference_patch_embed(x, weight, bias, patch_size)
    assert out.shape == (B, (H // patch_size) * (W // patch_size), embed_dim)
    assert jnp.allclose(out, ref, atol=1e-4, rtol=1e-4), "mismatch vs reference"

    print("KERNEL_OK")
</pallas_src>

<mosaic_0001>
module attributes {stable_mosaic.version = 11 : i64} {
  func.func @_patch_embed_kernel(%arg0: i32, %arg1: i32, %arg2: i32, %arg3: memref<1x16x64xf32, #tpu.memory_space<vmem>>, %arg4: memref<64x128xf32, #tpu.memory_space<vmem>>, %arg5: memref<1x128xf32, #tpu.memory_space<vmem>>, %arg6: memref<1x16x128xf32, #tpu.memory_space<vmem>>) attributes {dimension_semantics = [#tpu.dimension_semantics<parallel>, #tpu.dimension_semantics<parallel>, #tpu.dimension_semantics<parallel>], iteration_bounds = array<i64: 1, 2, 1>, scalar_prefetch = 0 : i64, scratch_operands = 0 : i64, tpu.core_type = #tpu.core_type<tc>, window_params = [{transform_indices = @transform_0, window_bounds = array<i64: 1, 16, 64>}, {transform_indices = @transform_1, window_bounds = array<i64: 64, 128>}, {transform_indices = @transform_2, window_bounds = array<i64: 1, 128>}, {transform_indices = @transform_3, window_bounds = array<i64: 1, 16, 128>}]} {
    %c0 = arith.constant 0 : index
    %c0_0 = arith.constant 0 : index
    %c0_1 = arith.constant 0 : index
    %0 = vector.load %arg3[%c0, %c0_0, %c0_1] : memref<1x16x64xf32, #tpu.memory_space<vmem>>, vector<1x16x64xf32>
    %1 = vector.shape_cast %0 : vector<1x16x64xf32> to vector<16x64xf32>
    %c0_2 = arith.constant 0 : index
    %c0_3 = arith.constant 0 : index
    %2 = vector.load %arg4[%c0_2, %c0_3] : memref<64x128xf32, #tpu.memory_space<vmem>>, vector<64x128xf32>
    %cst = arith.constant dense<0.000000e+00> : vector<16x128xf32>
    %3 = tpu.matmul %1, %2, %cst {dimension_numbers = #tpu.dot_dimension_numbers<[1], [0], [0], [1], [0, 0, 1, 1], [], []>} : vector<16x64xf32>, vector<64x128xf32>, vector<16x128xf32> -> vector<16x128xf32>
    %c0_4 = arith.constant 0 : index
    %c0_5 = arith.constant 0 : index
    %4 = vector.load %arg5[%c0_4, %c0_5] : memref<1x128xf32, #tpu.memory_space<vmem>>, vector<1x128xf32>
    %5 = vector.broadcast %4 : vector<1x128xf32> to vector<16x128xf32>
    %6 = arith.addf %3, %5 : vector<16x128xf32>
    %c0_6 = arith.constant 0 : index
    %c0_7 = arith.constant 0 : index
    %c0_8 = arith.constant 0 : index
    %7 = vector.load %arg6[%c0_6, %c0_7, %c0_8] : memref<1x16x128xf32, #tpu.memory_space<vmem>>, vector<1x16x128xf32>
    %8 = vector.shape_cast %7 : vector<1x16x128xf32> to vector<16x128xf32>
    %9 = vector.shape_cast %6 : vector<16x128xf32> to vector<1x16x128xf32>
    tpu.vector_store %arg6[%c0_6, %c0_7, %c0_8], %9 {strides = array<i32>} : memref<1x16x128xf32, #tpu.memory_space<vmem>>, vector<1x16x128xf32>,
    return
  }
  func.func @transform_0(%arg0: i32, %arg1: i32, %arg2: i32) -> (i32, i32, i32) {
    %c0_i32 = arith.constant 0 : i32
    %c0_i32_0 = arith.constant 0 : i32
    return %arg1, %arg2, %c0_i32 : i32, i32, i32
  }
  func.func @transform_1(%arg0: i32, %arg1: i32, %arg2: i32) -> (i32, i32) {
    %c0_i32 = arith.constant 0 : i32
    %c0_i32_0 = arith.constant 0 : i32
    return %c0_i32, %arg0 : i32, i32
  }
  func.func @transform_2(%arg0: i32, %arg1: i32, %arg2: i32) -> (i32, i32) {
    %c0_i32 = arith.constant 0 : i32
    %c0_i32_0 = arith.constant 0 : i32
    return %c0_i32, %arg0 : i32, i32
  }
  func.func @transform_3(%arg0: i32, %arg1: i32, %arg2: i32) -> (i32, i32, i32) {
    %c0_i32 = arith.constant 0 : i32
    return %arg1, %arg2, %arg0 : i32, i32, i32
  }
}

</mosaic_0001>

<llo_original>
// kernel: patch_embed.1
$region0: #{patch_embed.1}
  #allocation0 [shape = 'u32[]', space=smem, size = 0x4, offset = 0x4, fixed_abs, tag = 'smem constant byte address 0x4 - core index']
  #allocation1 [shape = 'u32[144,128]{1,0:T(1,128)}', space=vmem, size = 0x12000, scoped, tag = 'internal scratch']
  %s0 = inlined_call_operand.vmem [shape: f32[2,16,64], index: 0, kind: input, shape index: {}]
  %s1 = inlined_call_operand.vmem [shape: f32[64,128], index: 1, kind: input, shape index: {}]
  %s2 = inlined_call_operand.vmem [shape: f32[1,128], index: 2, kind: input, shape index: {}]
  %s3 = inlined_call_operand.hbm [shape: f32[2,16,128], index: 3, kind: output, shape index: {}]
  %s4 = sld [smem:[#allocation0]]
  $region45: #{patch_embed.1} parent=0
    _
  %s6 = ssub.s32 1, %s4
  %s7 = scalar_select 0, %s6, %s4
  $region1: #{patch_embed.1} parent=0
    #allocation2 [shape = 'u8[16384]{0}', space=vmem, size = 0x4000, scoped, tag = 'output window, operand 0']
    #allocation3 [shape = 's32[2]{0}', space=sflag, size = 0x8, scoped, tag = 'scoped memory for patch_embed.1']
    %8 = vsyncpa [#allocation3], 0
    %s9 = scalar_lea.sflag [#allocation3], 1
    %10 = vsyncpa %s9, 0
    loop: start=0, step=1, limit=4
    $region2: #{patch_embed.1} parent=1 // loop_pre_header
      _
    $region3: #{patch_embed.1} parent=1 // loop_header
      %s12 = sphi 0, %s16
      %p13 = scmp.ge.s32.totalorder %s12, 4
      %s19 = sphi 0, %s38
      %s20 = sphi 0, %s34
      %s21 = sphi 0, %s30
      %s22 = sphi 0, %s19
      %s23 = sphi 0, %s20
      %s24 = sphi 0, %s21
      %s25 = sphi 0, %s22
      %s26 = sphi 0, %s23
      %s27 = sphi 0, %s24
      %s43 = sphi 0, %s45
      %s46 = sphi 0, %s43
      %s47 = sphi 0, %s46
      %s63 = sphi 0, %s47
      %s69 = sphi 0, %s71
      %s72 = sphi 0, %s69
      %s73 = sphi 0, %s72
      %s89 = sphi 0, %s73
      %s95 = sphi 0, %s97
      %s98 = sphi 0, %s95
      %s99 = sphi 0, %s98
      %s115 = sphi 0, %s99
      %s125 = sphi 0, %s127
      %s128 = sphi 0, %s125
      %s129 = sphi 0, %s128
      %s145 = sphi 0, %s129
    $region4: #{patch_embed.1} parent=1 // loop_header_branch
      %15 = sbr.rel (%p13) target = $region8
    $region5: #{patch_embed.1} parent=1 // loop_body
      %s17 = ssub.s32 %s12, 1
      %s18 = ssub.s32 %s12, 2
      %s28 = sadd.s32 1, %s21
      %p29 = scmp.ge.s32.totalorder %s28, 1
      %s30 = scalar_select %p29, 0, %s28
      %s31 = sadd.s32 1, %s20
      %s32 = scalar_select %p29, %s31, %s20
      %p33 = scmp.ge.s32.totalorder %s32, 2
      %s34 = scalar_select %p33, 0, %s32
      %s35 = sadd.s32 1, %s19
      %s36 = scalar_select %p33, %s35, %s19
      %p37 = scmp.ge.s32.totalorder %s36, 1
      %s38 = scalar_select %p37, 0, %s36
      %s39 = ssub.s32 %s20, %s34
      %s40 = ssub.s32 %s21, %s30
      %s41 = sor.u32 %s39, %s40
      %p42 = scmp.eq.s32.totalorder %s41, 0
      %s44 = sadd.s32 %s43, 1
      %s45 = scalar_select %p42, %s43, %s44
      %p48 = pneg %p42
      %p49 = scmp.eq.s32.totalorder %s12, 1
      %p50 = por %p48, %p49
      %p51 = scmp.ne.s32.totalorder %s43, %s46
      %p52 = scmp.eq.s32.totalorder %s12, 0
      %p53 = por %p51, %p52
      %p54 = scmp.ne.s32.totalorder %s43, %s46
      %p55 = scmp.eq.s32.totalorder %s17, 1
      %p56 = por %p54, %p55
      %p57 = scmp.ne.s32.totalorder %s46, %s47
      %p58 = scmp.eq.s32.totalorder %s17, 0
      %p59 = por %p57, %p58
      %p60 = scmp.ne.s32.totalorder %s46, %s47
      %p61 = scmp.eq.s32.totalorder %s18, 1
      %p62 = por %p60, %p61
      %p64 = scmp.ne.s32.totalorder %s47, %s63
      %p65 = scmp.eq.s32.totalorder %s18, 0
      %p66 = por %p64, %p65
      %s67 = ssub.s32 %s19, %s38
      %p68 = scmp.eq.s32.totalorder %s67, 0
      %s70 = sadd.s32 %s69, 1
      %s71 = scalar_select %p68, %s69, %s70
      %p74 = pneg %p68
      %p75 = scmp.eq.s32.totalorder %s12, 1
      %p76 = por %p74, %p75
      %p77 = scmp.ne.s32.totalorder %s69, %s72
      %p78 = scmp.eq.s32.totalorder %s12, 0
      %p79 = por %p77, %p78
      %p80 = scmp.ne.s32.totalorder %s69, %s72
      %p81 = scmp.eq.s32.totalorder %s17, 1
      %p82 = por %p80, %p81
      %p83 = scmp.ne.s32.totalorder %s72, %s73
      %p84 = scmp.eq.s32.totalorder %s17, 0
      %p85 = por %p83, %p84
      %p86 = scmp.ne.s32.totalorder %s72, %s73
      %p87 = scmp.eq.s32.totalorder %s18, 1
      %p88 = por %p86, %p87
      %p90 = scmp.ne.s32.totalorder %s73, %s89
      %p91 = scmp.eq.s32.totalorder %s18, 0
      %p92 = por %p90, %p91
      %s93 = ssub.s32 %s19, %s38
      %p94 = scmp.eq.s32.totalorder %s93, 0
      %s96 = sadd.s32 %s95, 1
      %s97 = scalar_select %p94, %s95, %s96
      %p100 = pneg %p94
      %p101 = scmp.eq.s32.totalorder %s12, 1
      %p102 = por %p100, %p101
      %p103 = scmp.ne.s32.totalorder %s95, %s98
      %p104 = scmp.eq.s32.totalorder %s12, 0
      %p105 = por %p103, %p104
      %p106 = scmp.ne.s32.totalorder %s95, %s98
      %p107 = scmp.eq.s32.totalorder %s17, 1
      %p108 = por %p106, %p107
      %p109 = scmp.ne.s32.totalorder %s98, %s99
      %p110 = scmp.eq.s32.totalorder %s17, 0
      %p111 = por %p109, %p110
      %p112 = scmp.ne.s32.totalorder %s98, %s99
      %p113 = scmp.eq.s32.totalorder %s18, 1
      %p114 = por %p112, %p113
      %p116 = scmp.ne.s32.totalorder %s99, %s115
      %p117 = scmp.eq.s32.totalorder %s18, 0
      %p118 = por %p116, %p117
      %s119 = ssub.s32 %s20, %s34
      %s120 = ssub.s32 %s21, %s30
      %s121 = sor.u32 %s119, %s120
      %s122 = ssub.s32 %s19, %s38
      %s123 = sor.u32 %s121, %s122
      %p124 = scmp.eq.s32.totalorder %s123, 0
      %s126 = sadd.s32 %s125, 1
      %s127 = scalar_select %p124, %s125, %s126
      %p130 = pneg %p124
      %p131 = scmp.eq.s32.totalorder %s12, 1
      %p132 = por %p130, %p131
      %p133 = scmp.ne.s32.totalorder %s125, %s128
      %p134 = scmp.eq.s32.totalorder %s12, 0
      %p135 = por %p133, %p134
      %p136 = scmp.ne.s32.totalorder %s125, %s128
      %p137 = scmp.eq.s32.totalorder %s17, 1
      %p138 = por %p136, %p137
      %p139 = scmp.ne.s32.totalorder %s128, %s129
      %p140 = scmp.eq.s32.totalorder %s17, 0
      %p141 = por %p139, %p140
      %p142 = scmp.ne.s32.totalorder %s128, %s129
      %p143 = scmp.eq.s32.totalorder %s18, 1
      %p144 = por %p142, %p143
      %p146 = scmp.ne.s32.totalorder %s129, %s145
      %p147 = scmp.eq.s32.totalorder %s18, 0
      %p148 = por %p146, %p147
      %p149 = scmp.le.s32.totalorder 1, %s12
      %p150 = scmp.lt.s32.totalorder %s12, 3
      %p151 = pnand %p149, %p150
      %p152 = pneg %p151
      // Predicated region
      $region9: #{patch_embed.1} parent=5 // pred_check
        _
      $region10: #{patch_embed.1} parent=5 // pred_check_branch
        %154 = sbr.rel (%p151) target = $region12
      $region11: #{patch_embed.1} parent=5 // pred_region
        %s155 = ssub.s32 %s12, 1
        // Predicated region
        $region13: #{patch_embed.1} parent=11 // pred_check
          %p156 = pneg %p85
        $region14: #{patch_embed.1} parent=11 // pred_check_branch
          %158 = sbr.rel (%p156) target = $region16
        $region15: #{patch_embed.1} parent=11 // pred_region
          %p159 = scmp.lt.s32.totalorder %s22, 0
          %s160 = scalar_select %p159, %s22, 0
          %s161 = smul.addr %s160, 8
          %s162 = scalar_lea.vmem %s1, %s161
        $region16: #{patch_embed.1} parent=11 // pred_fallthru
          _
        // Predicated region
        $region17: #{patch_embed.1} parent=11 // pred_check
          %p163 = pneg %p111
        $region18: #{patch_embed.1} parent=11 // pred_check_branch
          %165 = sbr.rel (%p163) target = $region20
        $region19: #{patch_embed.1} parent=11 // pred_region
          %p166 = scmp.lt.s32.totalorder %s22, 0
          %s167 = scalar_select %p166, %s22, 0
          %s168 = scalar_lea.vmem %s2, %s167
        $region20: #{patch_embed.1} parent=11 // pred_fallthru
          _
      $region12: #{patch_embed.1} parent=5 // pred_fallthru
        _
      %p169 = scmp.lt.s32.totalorder %s12, 2
      // Predicated region
      $region21: #{patch_embed.1} parent=5 // pred_check
        %p170 = pneg %p169
      $region22: #{patch_embed.1} parent=5 // pred_check_branch
        %172 = sbr.rel (%p170) target = $region24
      $region23: #{patch_embed.1} parent=5 // pred_region
        // Predicated region
        $region25: #{patch_embed.1} parent=23 // pred_check
          %p173 = pneg %p53
        $region26: #{patch_embed.1} parent=23 // pred_check_branch
          %175 = sbr.rel (%p173) target = $region28
        $region27: #{patch_embed.1} parent=23 // pred_region
          %s176 = smul.u32 2, %s21
          %p177 = scmp.lt.s32.totalorder %s20, 1
          %s178 = scalar_select %p177, %s20, 1
          %p179 = scmp.lt.s32.totalorder %s176, 1
          %s180 = scalar_select %p179, %s176, 1
          %s181 = smul.addr %s178, 2
          %s182 = sadd.s32 %s180, %s181
          %s183 = smul.addr %s182, 8
          %s184 = scalar_lea.vmem %s0, %s183
          %s185 = smul.u32 2, %s21
        $region28: #{patch_embed.1} parent=23 // pred_fallthru
          _
      $region24: #{patch_embed.1} parent=5 // pred_fallthru
        _
      %p186 = scmp.le.s32.totalorder 1, %s12
      %p187 = scmp.lt.s32.totalorder %s12, 3
      %p188 = pnand %p186, %p187
      %p189 = pneg %p188
      // Predicated region
      $region29: #{patch_embed.1} parent=5 // pred_check
        _
      $region30: #{patch_embed.1} parent=5 // pred_check_branch
        %191 = sbr.rel (%p188) target = $region32
      $region31: #{patch_embed.1} parent=5 // pred_region
        %s192 = ssub.s32 %s12, 1
        %s193 = smul.u32 2, %s24
        %p194 = scmp.lt.s32.totalorder %s23, 1
        %s195 = scalar_select %p194, %s23, 1
        %p196 = scmp.lt.s32.totalorder %s193, 1
        %s197 = scalar_select %p196, %s193, 1
        %s198 = smul.addr %s195, 2
        %s199 = sadd.s32 %s197, %s198
        %s200 = smul.addr %s199, 8
        %s201 = scalar_lea.vmem %s0, %s200
        %p202 = pneg %p59
        %p203 = pneg %p56
        %p204 = scmp.lt.s32.totalorder %s22, 0
        %s205 = scalar_select %p204, %s22, 0
        %s206 = smul.addr %s205, 8
        %s207 = scalar_lea.vmem %s1, %s206
        %p208 = pneg %p85
        %p209 = pneg %p82
        %p210 = scmp.lt.s32.totalorder %s22, 0
        %s211 = scalar_select %p210, %s22, 0
        %s212 = scalar_lea.vmem %s2, %s211
        %p213 = pneg %p111
        %p214 = pneg %p108
        %p215 = pneg %p141
        %p216 = pneg %p138
        %s217 = sand.u32 %s128, 1
        %s218 = scalar_lea.sflag [#allocation3], %s217
        %s219 = sand.u32 %s128, 1
        %s220 = smul.addr %s219, 16
        %s221 = scalar_lea.vmem [#allocation2], %s220
        %s222 = smul.u32 2, %s24
        %p223 = scmp.lt.s32.totalorder %s23, 1
        %s224 = scalar_select %p223, %s23, 1
        %p225 = scmp.lt.s32.totalorder %s222, 1
        %s226 = scalar_select %p225, %s222, 1
        %s227 = smul.addr %s224, 2
        %s228 = sadd.s32 %s226, %s227
        %s229 = smul.addr %s228, 8
        %s230 = scalar_lea.vmem %s0, %s229
        %s231 = smul.u32 2, %s24
        %p232 = scmp.lt.s32.totalorder %s22, 0
        %s233 = scalar_select %p232, %s22, 0
        %s234 = smul.addr %s233, 8
        %s235 = scalar_lea.vmem %s1, %s234
        %p236 = scmp.lt.s32.totalorder %s22, 0
        %s237 = scalar_select %p236, %s22, 0
        %s238 = scalar_lea.vmem %s2, %s237
        %s239 = smul.u32 2, %s24
        %v240 = vld [vmem:[%s230] sm:$0xff]
        %v241 = vld [vmem:[%s230 + $0x8] sm:$0xff]
        %v242 = vld [vmem:[%s235] sm:$0xff]
        %v243 = vld [vmem:[%s235 + $0x8] sm:$0xff]
        %v244 = vld [vmem:[%s235 + $0x10] sm:$0xff]
        %v245 = vld [vmem:[%s235 + $0x18] sm:$0xff]
        %v246 = vld [vmem:[%s235 + $0x20] sm:$0xff]
        %v247 = vld [vmem:[%s235 + $0x28] sm:$0xff]
        %v248 = vld [vmem:[%s235 + $0x30] sm:$0xff]
        %v249 = vld [vmem:[%s235 + $0x38] sm:$0xff]
        %v250 = vld [vmem:[%s238] sm:$0x1]
        %v252 = vlaneseq
        %v253 = vshrl.u32 %v252, 7
        %v254 = vsub.s32 0, %v253
        %v255 = vrot.slane %v250, %v254
        %vm257 = vcmask 523264
        %v259 = vsel %vm257, %v240, 0
        %v262 = vsel %vm257, %v241, 0
        %264 = vmatprep.subr.mxu0 0.0
        %265 = vmatpush1.msra.mxu0 %v242
        %266 = vmatprep.subr.mxu0 0.0
        %267 = vmatpush1.msra.mxu0 %v243
        %268 = vmatprep.subr.mxu0 0.0
        %269 = vmatpush1.msra.mxu0 %v244
        %270 = vmatprep.subr.mxu0 0.0
        %271 = vmatpush1.msra.mxu0 %v245
        %272 = vmatprep.subr.mxu0 0.0
        %273 = vmatpush1.msra.mxu0 %v246
        %274 = vmatprep.subr.mxu0 0.0
        %275 = vmatpush1.msra.mxu0 %v247
        %276 = vmatprep.subr.mxu0 0.0
        %277 = vmatpush1.msra.mxu0 %v248
        %278 = vmatprep.subr.mxu0 0.0
        %279 = vmatpush1.msra.mxu0 %v249
        %280 = vmatprep.subr.mxu0 0.0
        %281 = vmatpush1.msra.mxu0 0.0
        %282 = vmatprep.subr.mxu0 0.0
        %283 = vmatpush1.msra.mxu0 0.0
        %284 = vmatprep.subr.mxu0 0.0
        %285 = vmatpush1.msra.mxu0 0.0
        %286 = vmatprep.subr.mxu0 0.0
        %287 = vmatpush1.msra.mxu0 0.0
        %288 = vmatprep.subr.mxu0 0.0
        %289 = vmatpush1.msra.mxu0 0.0
        %290 = vmatprep.subr.mxu0 0.0
        %291 = vmatpush1.msra.mxu0 0.0
        %292 = vmatprep.subr.mxu0 0.0
        %293 = vmatpush1.msra.mxu0 0.0
        %294 = vmatprep.subr.mxu0 0.0
        %295 = vmatpush1.msra.mxu0 0.0
        %296 = vmatprep.subr.mxu0 0.0
        %297 = vmatpush1.msra.mxu0 0.0
        %298 = vmatprep.subr.mxu0 0.0
        %299 = vmatpush1.msra.mxu0 0.0
        %300 = vmatprep.subr.mxu0 0.0
        %301 = vmatpush1.msra.mxu0 0.0
        %302 = vmatprep.subr.mxu0 0.0
        %303 = vmatpush1.msra.mxu0 0.0
        %304 = vmatprep.subr.mxu0 0.0
        %305 = vmatpush1.msra.mxu0 0.0
        %306 = vmatprep.subr.mxu0 0.0
        %307 = vmatpush1.msra.mxu0 0.0
        %308 = vmatprep.subr.mxu0 0.0
        %309 = vmatpush1.msra.mxu0 0.0
        %310 = vmatprep.subr.mxu0 0.0
        %311 = vmatpush1.msra.mxu0 0.0
        %312 = vmatprep.subr.mxu0 0.0
        %313 = vmatpush1.msra.mxu0 0.0
        %314 = vmatprep.subr.mxu0 0.0
        %315 = vmatpush1.msra.mxu0 0.0
        %316 = vmatprep.subr.mxu0 0.0
        %317 = vmatpush1.msra.mxu0 0.0
        %318 = vmatprep.subr.mxu0 0.0
        %319 = vmatpush1.msra.mxu0 0.0
        %320 = vmatprep.subr.mxu0 0.0
        %321 = vmatpush1.msra.mxu0 0.0
        %322 = vmatprep.subr.mxu0 0.0
        %323 = vmatpush1.msra.mxu0 0.0
        %324 = vmatprep.subr.mxu0 0.0
        %325 = vmatpush1.msra.mxu0 0.0
        %326 = vmatprep.subr.mxu0 0.0
        %327 = vmatpush1.msra.mxu0 0.0
        %328 = vmatprep.mubr.f32.mxu0 0.0
        %329 = vmatmul.mubr.f32.gmra.mrb[0].mxu0 %v259
        %v330 = vpop.f32.mrb[0].mxu0
        %v331 = vadd.f32 %v255, %v330
        %v332 = vpop.f32.mrb[0].mxu0
        %333 = vmatprep.mubr.f32.mxu0 0.0
        %334 = vmatmul.mubr.f32.gmra.mrb[0].mxu0 %v262
        %v335 = vpop.f32.mrb[0].mxu0
        %v336 = vadd.f32 %v255, %v335
        %v337 = vpop.f32.mrb[0].mxu0
        %338 = vdwg.mxu0
        %339 = vst [vmem:[%s221] sm:$0xff] %v331
        %340 = vst [vmem:[%s221 + $0x8] sm:$0xff] %v336
        %s341 = sand.u32 %s128, 1
        %s342 = scalar_lea.sflag [#allocation3], %s341
        %s343 = sand.u32 %s128, 1
        %s344 = smul.addr %s343, 16
        %s345 = scalar_lea.vmem [#allocation2], %s344
        // Predicated region
        $region33: #{patch_embed.1} parent=31 // pred_check
          %p346 = pneg %p138
        $region34: #{patch_embed.1} parent=31 // pred_check_branch
          %348 = sbr.rel (%p346) target = $region36
        $region35: #{patch_embed.1} parent=31 // pred_region
          %s349 = smul.u32 2, %s24
          %s351 = ssub.s32 256, 256
          %352 = vsyncadd %s342, %s351
          %s353 = sadd.s32 %s22, %s349
          %s354 = smul.addr %s23, 2
          %s355 = sadd.s32 %s353, %s354
          %s356 = smul.addr %s355, 128
          %s357 = scalar_lea.hbm %s3, %s356
          %s358 = sshll.u32 %s345, 4
          %s359 = int_to_ptr.vmem [resolvable:$true] %s358
          %364 = dma.vmem_to_hbm [thread:$0]  %s359, 256, %s357, %s342, 128, 128, 8
        $region36: #{patch_embed.1} parent=31 // pred_fallthru
          _
      $region32: #{patch_embed.1} parent=5 // pred_fallthru
        _
      %p365 = scmp.le.s32.totalorder 2, %s12
      // Predicated region
      $region37: #{patch_embed.1} parent=5 // pred_check
        %p366 = pneg %p365
      $region38: #{patch_embed.1} parent=5 // pred_check_branch
        %368 = sbr.rel (%p366) target = $region40
      $region39: #{patch_embed.1} parent=5 // pred_region
        %s369 = ssub.s32 %s12, 2
        // Predicated region
        $region41: #{patch_embed.1} parent=39 // pred_check
          %p370 = pneg %p144
        $region42: #{patch_embed.1} parent=39 // pred_check_branch
          %372 = sbr.rel (%p370) target = $region44
        $region43: #{patch_embed.1} parent=39 // pred_region
          %s373 = sand.u32 %s129, 1
          %s374 = scalar_lea.sflag [#allocation3], %s373
          %s375 = sand.u32 %s129, 1
          %s376 = smul.addr %s375, 16
          %s377 = scalar_lea.vmem [#allocation2], %s376
          %378 = dma.done %s374, 256
        $region44: #{patch_embed.1} parent=39 // pred_fallthru
          _
      $region40: #{patch_embed.1} parent=5 // pred_fallthru
        _
    $region6: #{patch_embed.1} parent=1 // loop_footer
      %s16 = sadd.s32 1, %s12
    $region7: #{patch_embed.1} parent=1 // loop_footer_branch
      %11 = sbr.rel target = $region3
    $region8: #{patch_embed.1} parent=1 // loop_exit
      _
    %379 = vsyncpa [#allocation3], 1
    %s380 = scalar_lea.sflag [#allocation3], 1
    %381 = vsyncpa %s380, 1

</llo_original>
